<compile_context>
chip_gen: v5e
topology: v5e:2x2
jax: 0.10.0
libtpu: 0.0.40
codegen_flags: <defaults>
</compile_context>

<pallas_src>
import jax
import jax.numpy as jnp
from jax.experimental import pallas as pl
from jax.experimental.pallas import tpu as pltpu


def _round_up(x, m):
    return ((x + m - 1) // m) * m


def _device_kind():
    try:
        return jax.devices()[0].device_kind.lower()
    except Exception:
        return ""


def _default_compute_dtype():
    """bf16 matmul inputs on v5e and newer (MXU consumes bf16 natively);
    f32 on v2/v3/v4 or unknown devices."""
    kind = _device_kind()
    if any(g in kind for g in ("v2", "v3", "v4")):
        return jnp.float32
    if not kind:
        return jnp.float32
    return jnp.bfloat16


def _num_tensorcores():
    """Heuristic: v7x-class chips have 2 TensorCores per chip."""
    kind = _device_kind()
    return 2 if "v7" in kind else 1


def mlp_kernel(x_ref, w1_ref, b1_ref, w2_ref, b2_ref, w3_ref, b3_ref, o_ref):
    # Three MXU matmuls with f32 accumulation; bias add + sigmoid in f32 on
    # VPU/EUP; everything for this batch tile is resident in VMEM.
    x = x_ref[...]
    h1 = jnp.dot(x, w1_ref[...], preferred_element_type=jnp.float32) + b1_ref[...]
    h1 = jax.nn.sigmoid(h1).astype(x.dtype)      # cast is just a pack for the next MXU op
    h2 = jnp.dot(h1, w2_ref[...], preferred_element_type=jnp.float32) + b2_ref[...]
    h2 = jax.nn.sigmoid(h2).astype(x.dtype)
    out = jnp.dot(h2, w3_ref[...], preferred_element_type=jnp.float32) + b3_ref[...]
    o_ref[...] = out.astype(o_ref.dtype)


def prepare_params(params, compute_dtype=None):
    """Pad/cast weights & biases once (hoisted out of the per-call path).

    params: dict w1,b1,w2,b2,w3,b3; weights are [in, out], biases [1, out].
    Output feature dims are lane-padded to 128; the w1 input dim stays at the
    true D_in so it matches the unpadded x feature width.
    """
    if compute_dtype is None:
        compute_dtype = _default_compute_dtype()

    D_in, H1 = params["w1"].shape
    H2 = params["w2"].shape[1]
    D_out = params["w3"].shape[1]
    H1p, H2p, Dop = _round_up(H1, 128), _round_up(H2, 128), _round_up(D_out, 128)

    def pad2(a, rows, cols, dtype):
        return jnp.zeros((rows, cols), dtype).at[: a.shape[0], : a.shape[1]].set(
            a.astype(dtype))

    return dict(
        w1=pad2(params["w1"], D_in, H1p, compute_dtype),
        w2=pad2(params["w2"], H1p, H2p, compute_dtype),
        w3=pad2(params["w3"], H2p, Dop, compute_dtype),
        b1=pad2(params["b1"], 1, H1p, jnp.float32),
        b2=pad2(params["b2"], 1, H2p, jnp.float32),
        b3=pad2(params["b3"], 1, Dop, jnp.float32),
        dims=(D_in, H1, H2, D_out),
        padded_dims=(D_in, H1p, H2p, Dop),
        compute_dtype=compute_dtype,
    )


def mlp_forward(x, prepped, *, tb=None):
    """Fused 3-layer MLP forward. `prepped` comes from prepare_params()."""
    B, D_in = x.shape
    compute_dtype = prepped["compute_dtype"]
    D_in_p, H1p, H2p, Dop = prepped["padded_dims"]
    assert D_in == D_in_p, "x feature dim must match the params' input dim"
    D_out = prepped["dims"][3]

    # bf16 packs 16 rows per sublane group; f32 packs 8.
    row_align = 16 if compute_dtype == jnp.bfloat16 else 8

    if tb is None:
        # One big tile (cap 2048 rows: x dbuf ~1 MiB bf16, out dbuf ~1-2 MiB,
        # plus ~100 KiB resident weights -> trivially inside v7x's 64 MiB VMEM).
        tb = min(2048, _round_up(B, row_align))
        # On 2-TC chips, keep at least 2 batch tiles for large B so the
        # "parallel" axis can be megacore-sharded.
        n_tc = _num_tensorcores()
        if n_tc > 1:
            tb = min(tb, max(row_align, _round_up(pl.cdiv(B, n_tc), row_align)))
    tb = _round_up(tb, row_align)
    Bp = _round_up(B, tb)

    # Pad only the batch dim of x (and only when needed); keep the true feature
    # width: last block dim == full array dim satisfies the (8,128) rule and
    # avoids the 4x lane-pad read amplification over x.
    x = x.astype(compute_dtype)
    if Bp != B:
        x = jnp.zeros((Bp, D_in), compute_dtype).at[:B, :].set(x)

    grid = (Bp // tb,)
    full = lambda i: (0, 0)  # weights/biases resident across all batch tiles

    # Write the padded output in the compute dtype (halves HBM writeback on the
    # bf16 path); the [:B, :D_out] slice + f32 cast happens below.
    out = pl.pallas_call(
        mlp_kernel,
        out_shape=jax.ShapeDtypeStruct((Bp, Dop), compute_dtype),
        grid=grid,
        in_specs=[
            pl.BlockSpec((tb, D_in), lambda i: (i, 0)),   # x tile over batch
            pl.BlockSpec((D_in, H1p), full),
            pl.BlockSpec((1, H1p), full),
            pl.BlockSpec((H1p, H2p), full),
            pl.BlockSpec((1, H2p), full),
            pl.BlockSpec((H2p, Dop), full),
            pl.BlockSpec((1, Dop), full),
        ],
        out_specs=pl.BlockSpec((tb, Dop), lambda i: (i, 0)),
        compiler_params=pltpu.CompilerParams(
            dimension_semantics=("parallel",),
            # Resident weights + double-buffered x/out tiles stay in the low
            # single-digit MiB even at tb=2048; 32 MiB leaves ample headroom
            # on every generation including v7x (64 MiB physical).
            vmem_limit_bytes=32 * 1024 * 1024,
        ),
    )(x, prepped["w1"], prepped["b1"], prepped["w2"], prepped["b2"],
      prepped["w3"], prepped["b3"])

    return out[:B, :D_out].astype(jnp.float32)


def init_params(key, D_in, H1, H2, D_out):
    """PyTorch-style uniform(-1/sqrt(fan_in), 1/sqrt(fan_in)) init.
    Weights stored as [in, out] (transpose of PyTorch's [out, in])."""
    ks = jax.random.split(key, 6)

    def lin(kw, kb, fin, fout):
        bound = 1.0 / jnp.sqrt(fin)
        w = jax.random.uniform(kw, (fin, fout), jnp.float32, -bound, bound)
        b = jax.random.uniform(kb, (1, fout), jnp.float32, -bound, bound)
        return w, b

    w1, b1 = lin(ks[0], ks[1], D_in, H1)
    w2, b2 = lin(ks[2], ks[3], H1, H2)
    w3, b3 = lin(ks[4], ks[5], H2, D_out)
    return dict(w1=w1, b1=b1, w2=w2, b2=b2, w3=w3, b3=b3)


if __name__ == "__main__":
    key = jax.random.PRNGKey(0)
    B, D_in, H1, H2, D_out = 16, 32, 64, 32, 8
    kx, kp = jax.random.split(key)
    x = jax.random.normal(kx, (B, D_in), jnp.float32)
    params = init_params(kp, D_in, H1, H2, D_out)

    compute_dtype = _default_compute_dtype()
    prepped = prepare_params(params, compute_dtype)   # padded/cast once, reused per call
    out = mlp_forward(x, prepped)
    out = jax.block_until_ready(out)

    # Reference in plain JAX f32 (same math as the PyTorch module).
    h1 = jax.nn.sigmoid(x @ params["w1"] + params["b1"])
    h2 = jax.nn.sigmoid(h1 @ params["w2"] + params["b2"])
    ref = h2 @ params["w3"] + params["b3"]

    assert out.shape == (B, D_out)
    if compute_dtype == jnp.bfloat16:
        tol = dict(atol=5e-2, rtol=5e-2)   # bf16 matmul inputs/output, f32 accumulate
    else:
        tol = dict(atol=1e-5, rtol=1e-5)
    assert jnp.allclose(out, ref, **tol), float(jnp.max(jnp.abs(out - ref)))

    print("KERNEL_OK")
</pallas_src>

<mosaic_0001>
module attributes {stable_mosaic.version = 11 : i64} {
  func.func @mlp_kernel(%arg0: i32, %arg1: memref<16x32xbf16, #tpu.memory_space<vmem>>, %arg2: memref<32x128xbf16, #tpu.memory_space<vmem>>, %arg3: memref<1x128xf32, #tpu.memory_space<vmem>>, %arg4: memref<128x128xbf16, #tpu.memory_space<vmem>>, %arg5: memref<1x128xf32, #tpu.memory_space<vmem>>, %arg6: memref<128x128xbf16, #tpu.memory_space<vmem>>, %arg7: memref<1x128xf32, #tpu.memory_space<vmem>>, %arg8: memref<16x128xbf16, #tpu.memory_space<vmem>>) attributes {dimension_semantics = [#tpu.dimension_semantics<parallel>], iteration_bounds = array<i64: 1>, scalar_prefetch = 0 : i64, scratch_operands = 0 : i64, tpu.core_type = #tpu.core_type<tc>, window_params = [{transform_indices = @transform_0, window_bounds = array<i64: 16, 32>}, {pipeline_mode = #tpu.pipeline_mode<synchronous>, transform_indices = @transform_1, window_bounds = array<i64: 32, 128>}, {pipeline_mode = #tpu.pipeline_mode<synchronous>, transform_indices = @transform_2, window_bounds = array<i64: 1, 128>}, {pipeline_mode = #tpu.pipeline_mode<synchronous>, transform_indices = @transform_3, window_bounds = array<i64: 128, 128>}, {pipeline_mode = #tpu.pipeline_mode<synchronous>, transform_indices = @transform_4, window_bounds = array<i64: 1, 128>}, {pipeline_mode = #tpu.pipeline_mode<synchronous>, transform_indices = @transform_5, window_bounds = array<i64: 128, 128>}, {pipeline_mode = #tpu.pipeline_mode<synchronous>, transform_indices = @transform_6, window_bounds = array<i64: 1, 128>}, {transform_indices = @transform_7, window_bounds = array<i64: 16, 128>}]} {
    %c0 = arith.constant 0 : index
    %c0_0 = arith.constant 0 : index
    %0 = vector.load %arg1[%c0, %c0_0] : memref<16x32xbf16, #tpu.memory_space<vmem>>, vector<16x32xbf16>
    %c0_1 = arith.constant 0 : index
    %c0_2 = arith.constant 0 : index
    %1 = vector.load %arg2[%c0_1, %c0_2] : memref<32x128xbf16, #tpu.memory_space<vmem>>, vector<32x128xbf16>
    %cst = arith.constant dense<0.000000e+00> : vector<16x128xf32>
    %2 = tpu.matmul %0, %1, %cst {dimension_numbers = #tpu.dot_dimension_numbers<[1], [0], [0], [1], [0, 0, 1, 1], [], []>} : vector<16x32xbf16>, vector<32x128xbf16>, vector<16x128xf32> -> vector<16x128xf32>
    %c0_3 = arith.constant 0 : index
    %c0_4 = arith.constant 0 : index
    %3 = vector.load %arg3[%c0_3, %c0_4] : memref<1x128xf32, #tpu.memory_space<vmem>>, vector<1x128xf32>
    %4 = vector.broadcast %3 : vector<1x128xf32> to vector<16x128xf32>
    %5 = arith.addf %2, %4 : vector<16x128xf32>
    %6 = arith.negf %5 : vector<16x128xf32>
    %7 = math.exp %6 : vector<16x128xf32>
    %cst_5 = arith.constant 1.000000e+00 : f32
    %8 = vector.broadcast %cst_5 : f32 to vector<16x128xf32>
    %9 = arith.addf %8, %7 : vector<16x128xf32>
    %10 = arith.divf %8, %9 : vector<16x128xf32>
    %11 = arith.truncf %10 : vector<16x128xf32> to vector<16x128xbf16>
    %c0_6 = arith.constant 0 : index
    %c0_7 = arith.constant 0 : index
    %12 = vector.load %arg4[%c0_6, %c0_7] : memref<128x128xbf16, #tpu.memory_space<vmem>>, vector<128x128xbf16>
    %cst_8 = arith.constant dense<0.000000e+00> : vector<16x128xf32>
    %13 = tpu.matmul %11, %12, %cst_8 {dimension_numbers = #tpu.dot_dimension_numbers<[1], [0], [0], [1], [0, 0, 1, 1], [], []>} : vector<16x128xbf16>, vector<128x128xbf16>, vector<16x128xf32> -> vector<16x128xf32>
    %c0_9 = arith.constant 0 : index
    %c0_10 = arith.constant 0 : index
    %14 = vector.load %arg5[%c0_9, %c0_10] : memref<1x128xf32, #tpu.memory_space<vmem>>, vector<1x128xf32>
    %15 = vector.broadcast %14 : vector<1x128xf32> to vector<16x128xf32>
    %16 = arith.addf %13, %15 : vector<16x128xf32>
    %17 = arith.negf %16 : vector<16x128xf32>
    %18 = math.exp %17 : vector<16x128xf32>
    %cst_11 = arith.constant 1.000000e+00 : f32
    %19 = vector.broadcast %cst_11 : f32 to vector<16x128xf32>
    %20 = arith.addf %19, %18 : vector<16x128xf32>
    %21 = arith.divf %19, %20 : vector<16x128xf32>
    %22 = arith.truncf %21 : vector<16x128xf32> to vector<16x128xbf16>
    %c0_12 = arith.constant 0 : index
    %c0_13 = arith.constant 0 : index
    %23 = vector.load %arg6[%c0_12, %c0_13] : memref<128x128xbf16, #tpu.memory_space<vmem>>, vector<128x128xbf16>
    %cst_14 = arith.constant dense<0.000000e+00> : vector<16x128xf32>
    %24 = tpu.matmul %22, %23, %cst_14 {dimension_numbers = #tpu.dot_dimension_numbers<[1], [0], [0], [1], [0, 0, 1, 1], [], []>} : vector<16x128xbf16>, vector<128x128xbf16>, vector<16x128xf32> -> vector<16x128xf32>
    %c0_15 = arith.constant 0 : index
    %c0_16 = arith.constant 0 : index
    %25 = vector.load %arg7[%c0_15, %c0_16] : memref<1x128xf32, #tpu.memory_space<vmem>>, vector<1x128xf32>
    %26 = vector.broadcast %25 : vector<1x128xf32> to vector<16x128xf32>
    %27 = arith.addf %24, %26 : vector<16x128xf32>
    %28 = arith.truncf %27 : vector<16x128xf32> to vector<16x128xbf16>
    %c0_17 = arith.constant 0 : index
    %c0_18 = arith.constant 0 : index
    %29 = vector.load %arg8[%c0_17, %c0_18] : memref<16x128xbf16, #tpu.memory_space<vmem>>, vector<16x128xbf16>
    tpu.vector_store %arg8[%c0_17, %c0_18], %28 {strides = array<i32>} : memref<16x128xbf16, #tpu.memory_space<vmem>>, vector<16x128xbf16>,
    return
  }
  func.func @transform_0(%arg0: i32) -> (i32, i32) {
    %c0_i32 = arith.constant 0 : i32
    %c0_i32_0 = arith.constant 0 : i32
    return %arg0, %c0_i32 : i32, i32
  }
  func.func @transform_1(%arg0: i32) -> (i32, i32) {
    %c0_i32 = arith.constant 0 : i32
    %c0_i32_0 = arith.constant 0 : i32
    %c0_i32_1 = arith.constant 0 : i32
    return %c0_i32, %c0_i32_0 : i32, i32
  }
  func.func @transform_2(%arg0: i32) -> (i32, i32) {
    %c0_i32 = arith.constant 0 : i32
    %c0_i32_0 = arith.constant 0 : i32
    %c0_i32_1 = arith.constant 0 : i32
    return %c0_i32, %c0_i32_0 : i32, i32
  }
  func.func @transform_3(%arg0: i32) -> (i32, i32) {
    %c0_i32 = arith.constant 0 : i32
    %c0_i32_0 = arith.constant 0 : i32
    %c0_i32_1 = arith.constant 0 : i32
    return %c0_i32, %c0_i32_0 : i32, i32
  }
  func.func @transform_4(%arg0: i32) -> (i32, i32) {
    %c0_i32 = arith.constant 0 : i32
    %c0_i32_0 = arith.constant 0 : i32
    %c0_i32_1 = arith.constant 0 : i32
    return %c0_i32, %c0_i32_0 : i32, i32
  }
  func.func @transform_5(%arg0: i32) -> (i32, i32) {
    %c0_i32 = arith.constant 0 : i32
    %c0_i32_0 = arith.constant 0 : i32
    %c0_i32_1 = arith.constant 0 : i32
    return %c0_i32, %c0_i32_0 : i32, i32
  }
  func.func @transform_6(%arg0: i32) -> (i32, i32) {
    %c0_i32 = arith.constant 0 : i32
    %c0_i32_0 = arith.constant 0 : i32
    %c0_i32_1 = arith.constant 0 : i32
    return %c0_i32, %c0_i32_0 : i32, i32
  }
  func.func @transform_7(%arg0: i32) -> (i32, i32) {
    %c0_i32 = arith.constant 0 : i32
    %c0_i32_0 = arith.constant 0 : i32
    return %arg0, %c0_i32 : i32, i32
  }
}

</mosaic_0001>

<llo_original>
// kernel: tpu_custom_call.1
$region0: #{tpu_custom_call.1}
  #allocation0 [shape = 'u32[]', space=smem, size = 0x4, offset = 0x4, fixed_abs, tag = 'smem constant byte address 0x4 - core index']
  #allocation1 [shape = 'u32[72,128]{1,0:T(1,128)}', space=vmem, size = 0x9000, scoped, tag = 'internal scratch']
  %s0 = inlined_call_operand.hbm [shape: bf16[16,32], index: 0, kind: input, shape index: {}]
  %s1 = inlined_call_operand.hbm [shape: bf16[32,128], index: 1, kind: input, shape index: {}]
  %s2 = inlined_call_operand.vmem [shape: f32[1,128], index: 2, kind: input, shape index: {}]
  %s3 = inlined_call_operand.hbm [shape: bf16[128,128], index: 3, kind: input, shape index: {}]
  %s4 = inlined_call_operand.vmem [shape: f32[1,128], index: 4, kind: input, shape index: {}]
  %s5 = inlined_call_operand.hbm [shape: bf16[128,128], index: 5, kind: input, shape index: {}]
  %s6 = inlined_call_operand.vmem [shape: f32[1,128], index: 6, kind: input, shape index: {}]
  %s7 = inlined_call_operand.hbm [shape: bf16[16,128], index: 7, kind: output, shape index: {}]
  %s8 = sld [smem:[#allocation0]]
  $region54: #{tpu_custom_call.1} parent=0
    _
  %s10 = ssub.s32 1, %s8
  %s11 = scalar_select 0, %s10, %s8
  $region1: #{tpu_custom_call.1} parent=0
    #allocation2 [shape = 'u8[4096]{0}', space=vmem, size = 0x1000, scoped, tag = 'input window, operand 0, single buffered']
    #allocation3 [shape = 's32[1]{0}', space=sflag, size = 0x4, scoped, tag = 'scoped memory for tpu_custom_call.1']
    #allocation4 [shape = 's32[1]{0}', space=sflag, size = 0x4, scoped, tag = 'scoped memory for tpu_custom_call.1']
    #allocation5 [shape = 'u8[8192]{0}', space=vmem, size = 0x2000, scoped, tag = 'input window, operand 1, single buffered']
    #allocation6 [shape = 's32[1]{0}', space=sflag, size = 0x4, scoped, tag = 'scoped memory for tpu_custom_call.1']
    #allocation7 [shape = 'u8[32768]{0}', space=vmem, size = 0x8000, scoped, tag = 'input window, operand 3, single buffered']
    #allocation8 [shape = 'u8[32768]{0}', space=vmem, size = 0x8000, scoped, tag = 'input window, operand 5, single buffered']
    #allocation9 [shape = 's32[1]{0}', space=sflag, size = 0x4, scoped, tag = 'scoped memory for tpu_custom_call.1']
    #allocation10 [shape = 'u8[4096]{0}', space=vmem, size = 0x1000, scoped, tag = 'output window, operand 0, single buffered']
    %12 = vsyncpa [#allocation3], 0
    %13 = vsyncpa [#allocation6], 0
    %14 = vsyncpa [#allocation9], 0
    %15 = vsyncpa [#allocation4], 0
    // Predicated region
    $region2: #{tpu_custom_call.1} parent=1 // pred_check
      _
    $region3: #{tpu_custom_call.1} parent=1 // pred_check_branch
      %17 = sbr.rel (0) target = $region5
    $region4: #{tpu_custom_call.1} parent=1 // pred_region
      %19 = vsyncadd [#allocation3], 0
      %s20 = sshll.u32 %s0, 4
      %s21 = int_to_ptr.hbm [resolvable:$true] %s20
      %s22 = sshll.u32 [#allocation2], 4
      %s23 = int_to_ptr.vmem [resolvable:$true] %s22
      %28 = dma.hbm_to_vmem [thread:$0]  %s21, 128, %s23, [#allocation3], 64, 64, 4
    $region5: #{tpu_custom_call.1} parent=1 // pred_fallthru
      _
    // Predicated region
    $region6: #{tpu_custom_call.1} parent=1 // pred_check
      _
    $region7: #{tpu_custom_call.1} parent=1 // pred_check_branch
      %30 = sbr.rel (0) target = $region9
    $region8: #{tpu_custom_call.1} parent=1 // pred_region
      %32 = vsyncadd [#allocation6], 0
      %s33 = sshll.u32 %s1, 4
      %s34 = int_to_ptr.hbm [resolvable:$true] %s33
      %s35 = sshll.u32 [#allocation5], 4
      %s36 = int_to_ptr.vmem [resolvable:$true] %s35
      %41 = dma.hbm_to_vmem [thread:$0]  %s34, 256, %s36, [#allocation6], 64, 64, 4
    $region9: #{tpu_custom_call.1} parent=1 // pred_fallthru
      _
    // Predicated region
    $region10: #{tpu_custom_call.1} parent=1 // pred_check
      _
    $region11: #{tpu_custom_call.1} parent=1 // pred_check_branch
      %43 = sbr.rel (0) target = $region13
    $region12: #{tpu_custom_call.1} parent=1 // pred_region
      _
    $region13: #{tpu_custom_call.1} parent=1 // pred_fallthru
      _
    // Predicated region
    $region14: #{tpu_custom_call.1} parent=1 // pred_check
      _
    $region15: #{tpu_custom_call.1} parent=1 // pred_check_branch
      %45 = sbr.rel (0) target = $region17
    $region16: #{tpu_custom_call.1} parent=1 // pred_region
      %47 = vsyncadd [#allocation6], 0
      %s48 = sshll.u32 %s3, 4
      %s49 = int_to_ptr.hbm [resolvable:$true] %s48
      %s50 = sshll.u32 [#allocation7], 4
      %s51 = int_to_ptr.vmem [resolvable:$true] %s50
      %56 = dma.hbm_to_vmem [thread:$0]  %s49, 1024, %s51, [#allocation6], 64, 64, 4
    $region17: #{tpu_custom_call.1} parent=1 // pred_fallthru
      _
    // Predicated region
    $region18: #{tpu_custom_call.1} parent=1 // pred_check
      _
    $region19: #{tpu_custom_call.1} parent=1 // pred_check_branch
      %58 = sbr.rel (0) target = $region21
    $region20: #{tpu_custom_call.1} parent=1 // pred_region
      _
    $region21: #{tpu_custom_call.1} parent=1 // pred_fallthru
      _
    // Predicated region
    $region22: #{tpu_custom_call.1} parent=1 // pred_check
      _
    $region23: #{tpu_custom_call.1} parent=1 // pred_check_branch
      %60 = sbr.rel (0) target = $region25
    $region24: #{tpu_custom_call.1} parent=1 // pred_region
      %62 = vsyncadd [#allocation9], 0
      %s63 = sshll.u32 %s5, 4
      %s64 = int_to_ptr.hbm [resolvable:$true] %s63
      %s65 = sshll.u32 [#allocation8], 4
      %s66 = int_to_ptr.vmem [resolvable:$true] %s65
      %71 = dma.hbm_to_vmem [thread:$0]  %s64, 1024, %s66, [#allocation9], 64, 64, 4
    $region25: #{tpu_custom_call.1} parent=1 // pred_fallthru
      _
    // Predicated region
    $region26: #{tpu_custom_call.1} parent=1 // pred_check
      _
    $region27: #{tpu_custom_call.1} parent=1 // pred_check_branch
      %73 = sbr.rel (0) target = $region29
    $region28: #{tpu_custom_call.1} parent=1 // pred_region
      _
    $region29: #{tpu_custom_call.1} parent=1 // pred_fallthru
      _
    // Predicated region
    $region30: #{tpu_custom_call.1} parent=1 // pred_check
      _
    $region31: #{tpu_custom_call.1} parent=1 // pred_check_branch
      %75 = sbr.rel (0) target = $region33
    $region32: #{tpu_custom_call.1} parent=1 // pred_region
      %77 = dma.done [#allocation3], 128
    $region33: #{tpu_custom_call.1} parent=1 // pred_fallthru
      _
    // Predicated region
    $region34: #{tpu_custom_call.1} parent=1 // pred_check
      _
    $region35: #{tpu_custom_call.1} parent=1 // pred_check_branch
      %79 = sbr.rel (0) target = $region37
    $region36: #{tpu_custom_call.1} parent=1 // pred_region
      %81 = dma.done [#allocation6], 256
    $region37: #{tpu_custom_call.1} parent=1 // pred_fallthru
      _
    // Predicated region
    $region38: #{tpu_custom_call.1} parent=1 // pred_check
      _
    $region39: #{tpu_custom_call.1} parent=1 // pred_check_branch
      %83 = sbr.rel (0) target = $region41
    $region40: #{tpu_custom_call.1} parent=1 // pred_region
      %85 = dma.done [#allocation6], 1024
    $region41: #{tpu_custom_call.1} parent=1 // pred_fallthru
      _
    // Predicated region
    $region42: #{tpu_custom_call.1} parent=1 // pred_check
      _
    $region43: #{tpu_custom_call.1} parent=1 // pred_check_branch
      %87 = sbr.rel (0) target = $region45
    $region44: #{tpu_custom_call.1} parent=1 // pred_region
      %89 = dma.done [#allocation9], 1024
    $region45: #{tpu_custom_call.1} parent=1 // pred_fallthru
      _
    %v91 = vld [vmem:[#allocation2] sm:$0xf]
    %v92 = vld [vmem:[#allocation2 + $0x4] sm:$0xf]
    %v93 = vld [vmem:[#allocation5] sm:$0xf]
    %v94 = vld [vmem:[#allocation5 + $0x4] sm:$0xf]
    %v95 = vld [vmem:[#allocation5 + $0x8] sm:$0xf]
    %v96 = vld [vmem:[#allocation5 + $0xc] sm:$0xf]
    %v97 = vld [vmem:[%s2] sm:$0x1]
    %v99 = vperm.slane %v97, 0
    %v103 = vunpack.c.l.b16 %v91
    %v104 = vunpack.c.l.b16 %v92
    %v105 = vpack.c.b16 %v104, %v103
    %v110 = vunpack.c.l.b16 %v93
    %v111 = vunpack.c.l.b16 %v94
    %v112 = vunpack.c.l.b16 %v95
    %v113 = vunpack.c.l.b16 %v96
    %v114 = vpack.c.b16 %v111, %v110
    %v115 = vpack.c.b16 %v113, %v112
    %vm118 = vcmask 261120
    %v120 = vsel %vm118, %v105, 0
    %122 = vmatpush.bf16.msra.mxu0 0
    %123 = vmatpush.bf16.msra.mxu0 0
    %124 = vmatpush.bf16.msra.mxu0 0
    %125 = vmatpush.bf16.msra.mxu0 0
    %126 = vmatpush.bf16.msra.mxu0 0
    %127 = vmatpush.bf16.msra.mxu0 0
    %128 = vmatpush.bf16.msra.mxu0 %v115
    %129 = vmatpush.bf16.msra.mxu0 %v114
    %130 = vmatmul.bf16.gmra.mxu0 %v120
    %v131 = vpop.f32.mrf.mxu0
    %v132 = vadd.f32 %v99, %v131
    %v133 = vpop.f32.mrf.mxu0
    %v134 = vadd.f32 %v99, %v133
    %135 = vdwg.mxu0
    %v136 = vxor.u32 %v132, 2147483648
    %v137 = vxor.u32 %v134, 2147483648
    %v138 = vmul.f32 %v136, 1.442695
    %v139 = vpow.pop %v138
    %v140 = vmul.f32 %v137, 1.442695
    %v141 = vpow.pop %v140
    %v142 = vadd.f32 %v139, 1.0
    %v143 = vadd.f32 %v141, 1.0
    %v144 = vrcp.pop %v142
    %v145 = vmul.f32 %v142, %v144
    %v146 = vsub.f32 1.0, %v145
    %v147 = vmul.f32 %v144, %v146
    %v148 = vadd.f32 %v144, %v147
    %vm149 = vweird.f32 %v142
    %vm150 = vweird.f32 %v144
    %vm151 = vmor %vm149, %vm150
    %v152 = vsel %vm151, %v144, %v148
    %v153 = vand.u32 2147483647, %v142
    %vm154 = vcmp.eq.f32.partialorder %v153, 8.507059e+37
    %v155 = vand.u32 %v142, 2147483648
    %v156 = vor.u32 1.1754944e-38, %v155
    %v157 = vsel %vm154, %v156, %v152
    %v158 = vmul.f32 1.0, %v157
    %v159 = vrcp.pop %v143
    %v160 = vmul.f32 %v143, %v159
    %v161 = vsub.f32 1.0, %v160
    %v162 = vmul.f32 %v159, %v161
    %v163 = vadd.f32 %v159, %v162
    %vm164 = vweird.f32 %v143
    %vm165 = vweird.f32 %v159
    %vm166 = vmor %vm164, %vm165
    %v167 = vsel %vm166, %v159, %v163
    %v168 = vand.u32 2147483647, %v143
    %vm169 = vcmp.eq.f32.partialorder %v168, 8.507059e+37
    %v170 = vand.u32 %v143, 2147483648
    %v171 = vor.u32 1.1754944e-38, %v170
    %v172 = vsel %vm169, %v171, %v167
    %v173 = vmul.f32 1.0, %v172
    %v174 = vpack.c.bf16 %v173, %v158
    %v175 = vld [vmem:[#allocation7] sm:$0xf]
    %v176 = vld [vmem:[#allocation7 + $0x4] sm:$0xf]
    %v177 = vld [vmem:[#allocation7 + $0x8] sm:$0xf]
    %v178 = vld [vmem:[#allocation7 + $0xc] sm:$0xf]
    %v179 = vld [vmem:[#allocation7 + $0x10] sm:$0xf]
    %v180 = vld [vmem:[#allocation7 + $0x14] sm:$0xf]
    %v181 = vld [vmem:[#allocation7 + $0x18] sm:$0xf]
    %v182 = vld [vmem:[#allocation7 + $0x1c] sm:$0xf]
    %v183 = vld [vmem:[#allocation7 + $0x20] sm:$0xf]
    %v184 = vld [vmem:[#allocation7 + $0x24] sm:$0xf]
    %v185 = vld [vmem:[#allocation7 + $0x28] sm:$0xf]
    %v186 = vld [vmem:[#allocation7 + $0x2c] sm:$0xf]
    %v187 = vld [vmem:[#allocation7 + $0x30] sm:$0xf]
    %v188 = vld [vmem:[#allocation7 + $0x34] sm:$0xf]
    %v189 = vld [vmem:[#allocation7 + $0x38] sm:$0xf]
    %v190 = vld [vmem:[#allocation7 + $0x3c] sm:$0xf]
    %v191 = vld [vmem:[%s4] sm:$0x1]
    %v193 = vperm.slane %v191, 0
    %v211 = vunpack.c.l.b16 %v175
    %v212 = vunpack.c.l.b16 %v176
    %v213 = vunpack.c.l.b16 %v177
    %v214 = vunpack.c.l.b16 %v178
    %v215 = vunpack.c.l.b16 %v179
    %v216 = vunpack.c.l.b16 %v180
    %v217 = vunpack.c.l.b16 %v181
    %v218 = vunpack.c.l.b16 %v182
    %v219 = vunpack.c.l.b16 %v183
    %v220 = vunpack.c.l.b16 %v184
    %v221 = vunpack.c.l.b16 %v185
    %v222 = vunpack.c.l.b16 %v186
    %v223 = vunpack.c.l.b16 %v187
    %v224 = vunpack.c.l.b16 %v188
    %v225 = vunpack.c.l.b16 %v189
    %v226 = vunpack.c.l.b16 %v190
    %v227 = vpack.c.b16 %v212, %v211
    %v228 = vpack.c.b16 %v214, %v213
    %v229 = vpack.c.b16 %v216, %v215
    %v230 = vpack.c.b16 %v218, %v217
    %v231 = vpack.c.b16 %v220, %v219
    %v232 = vpack.c.b16 %v222, %v221
    %v233 = vpack.c.b16 %v224, %v223
    %v234 = vpack.c.b16 %v226, %v225
    %243 = vmatpush.bf16.msra.mxu0 %v234
    %244 = vmatpush.bf16.msra.mxu0 %v233
    %245 = vmatpush.bf16.msra.mxu0 %v232
    %246 = vmatpush.bf16.msra.mxu0 %v231
    %247 = vmatpush.bf16.msra.mxu0 %v230
    %248 = vmatpush.bf16.msra.mxu0 %v229
    %249 = vmatpush.bf16.msra.mxu0 %v228
    %250 = vmatpush.bf16.msra.mxu0 %v227
    %251 = vmatmul.bf16.gmra.mxu0 %v174
    %v252 = vpop.f32.mrf.mxu0
    %v253 = vadd.f32 %v193, %v252
    %v254 = vpop.f32.mrf.mxu0
    %v255 = vadd.f32 %v193, %v254
    %256 = vdwg.mxu0
    %v257 = vxor.u32 %v253, 2147483648
    %v258 = vxor.u32 %v255, 2147483648
    %v259 = vmul.f32 %v257, 1.442695
    %v260 = vpow.pop %v259
    %v261 = vmul.f32 %v258, 1.442695
    %v262 = vpow.pop %v261
    %v263 = vadd.f32 %v260, 1.0
    %v264 = vadd.f32 %v262, 1.0
    %v265 = vrcp.pop %v263
    %v266 = vmul.f32 %v263, %v265
    %v267 = vsub.f32 1.0, %v266
    %v268 = vmul.f32 %v265, %v267
    %v269 = vadd.f32 %v265, %v268
    %vm270 = vweird.f32 %v263
    %vm271 = vweird.f32 %v265
    %vm272 = vmor %vm270, %vm271
    %v273 = vsel %vm272, %v265, %v269
    %v274 = vand.u32 2147483647, %v263
    %vm275 = vcmp.eq.f32.partialorder %v274, 8.507059e+37
    %v276 = vand.u32 %v263, 2147483648
    %v277 = vor.u32 1.1754944e-38, %v276
    %v278 = vsel %vm275, %v277, %v273
    %v279 = vmul.f32 1.0, %v278
    %v280 = vrcp.pop %v264
    %v281 = vmul.f32 %v264, %v280
    %v282 = vsub.f32 1.0, %v281
    %v283 = vmul.f32 %v280, %v282
    %v284 = vadd.f32 %v280, %v283
    %vm285 = vweird.f32 %v264
    %vm286 = vweird.f32 %v280
    %vm287 = vmor %vm285, %vm286
    %v288 = vsel %vm287, %v280, %v284
    %v289 = vand.u32 2147483647, %v264
    %vm290 = vcmp.eq.f32.partialorder %v289, 8.507059e+37
    %v291 = vand.u32 %v264, 2147483648
    %v292 = vor.u32 1.1754944e-38, %v291
    %v293 = vsel %vm290, %v292, %v288
    %v294 = vmul.f32 1.0, %v293
    %v295 = vpack.c.bf16 %v294, %v279
    %v296 = vld [vmem:[#allocation8] sm:$0xf]
    %v297 = vld [vmem:[#allocation8 + $0x4] sm:$0xf]
    %v298 = vld [vmem:[#allocation8 + $0x8] sm:$0xf]
    %v299 = vld [vmem:[#allocation8 + $0xc] sm:$0xf]
    %v300 = vld [vmem:[#allocation8 + $0x10] sm:$0xf]
    %v301 = vld [vmem:[#allocation8 + $0x14] sm:$0xf]
    %v302 = vld [vmem:[#allocation8 + $0x18] sm:$0xf]
    %v303 = vld [vmem:[#allocation8 + $0x1c] sm:$0xf]
    %v304 = vld [vmem:[#allocation8 + $0x20] sm:$0xf]
    %v305 = vld [vmem:[#allocation8 + $0x24] sm:$0xf]
    %v306 = vld [vmem:[#allocation8 + $0x28] sm:$0xf]
    %v307 = vld [vmem:[#allocation8 + $0x2c] sm:$0xf]
    %v308 = vld [vmem:[#allocation8 + $0x30] sm:$0xf]
    %v309 = vld [vmem:[#allocation8 + $0x34] sm:$0xf]
    %v310 = vld [vmem:[#allocation8 + $0x38] sm:$0xf]
    %v311 = vld [vmem:[#allocation8 + $0x3c] sm:$0xf]
    %v312 = vld [vmem:[%s6] sm:$0x1]
    %v314 = vperm.slane %v312, 0
    %v332 = vunpack.c.l.b16 %v296
    %v333 = vunpack.c.l.b16 %v297
    %v334 = vunpack.c.l.b16 %v298
    %v335 = vunpack.c.l.b16 %v299
    %v336 = vunpack.c.l.b16 %v300
    %v337 = vunpack.c.l.b16 %v301
    %v338 = vunpack.c.l.b16 %v302
    %v339 = vunpack.c.l.b16 %v303
    %v340 = vunpack.c.l.b16 %v304
    %v341 = vunpack.c.l.b16 %v305
    %v342 = vunpack.c.l.b16 %v306
    %v343 = vunpack.c.l.b16 %v307
    %v344 = vunpack.c.l.b16 %v308
    %v345 = vunpack.c.l.b16 %v309
    %v346 = vunpack.c.l.b16 %v310
    %v347 = vunpack.c.l.b16 %v311
    %v348 = vpack.c.b16 %v333, %v332
    %v349 = vpack.c.b16 %v335, %v334
    %v350 = vpack.c.b16 %v337, %v336
    %v351 = vpack.c.b16 %v339, %v338
    %v352 = vpack.c.b16 %v341, %v340
    %v353 = vpack.c.b16 %v343, %v342
    %v354 = vpack.c.b16 %v345, %v344
    %v355 = vpack.c.b16 %v347, %v346
    %364 = vmatpush.bf16.msra.mxu0 %v355
    %365 = vmatpush.bf16.msra.mxu0 %v354
    %366 = vmatpush.bf16.msra.mxu0 %v353
    %367 = vmatpush.bf16.msra.mxu0 %v352
    %368 = vmatpush.bf16.msra.mxu0 %v351
    %369 = vmatpush.bf16.msra.mxu0 %v350
    %370 = vmatpush.bf16.msra.mxu0 %v349
    %371 = vmatpush.bf16.msra.mxu0 %v348
    %372 = vmatmul.bf16.gmra.mxu0 %v295
    %v373 = vpop.f32.mrf.mxu0
    %v374 = vadd.f32 %v314, %v373
    %v375 = vpop.f32.mrf.mxu0
    %v376 = vadd.f32 %v314, %v375
    %377 = vdwg.mxu0
    %v378 = vpack.c.bf16 %v374, %v374
    %v379 = vpack.c.bf16 %v376, %v376
    %380 = vst [vmem:[#allocation10] sm:$0xf] %v378
    %381 = vst [vmem:[#allocation10 + $0x4] sm:$0xf] %v379
    // Predicated region
    $region46: #{tpu_custom_call.1} parent=1 // pred_check
      _
    $region47: #{tpu_custom_call.1} parent=1 // pred_check_branch
      %383 = sbr.rel (0) target = $region49
    $region48: #{tpu_custom_call.1} parent=1 // pred_region
      %385 = vsyncadd [#allocation4], 0
      %s386 = sshll.u32 [#allocation10], 4
      %s387 = int_to_ptr.vmem [resolvable:$true] %s386
      %s388 = sshll.u32 %s7, 4
      %s389 = int_to_ptr.hbm [resolvable:$true] %s388
      %394 = dma.vmem_to_hbm [thread:$0]  %s387, 128, %s389, [#allocation4], 64, 64, 4
    $region49: #{tpu_custom_call.1} parent=1 // pred_fallthru
      _
    // Predicated region
    $region50: #{tpu_custom_call.1} parent=1 // pred_check
      _
    $region51: #{tpu_custom_call.1} parent=1 // pred_check_branch
      %396 = sbr.rel (0) target = $region53
    $region52: #{tpu_custom_call.1} parent=1 // pred_region
      %398 = dma.done [#allocation4], 128
    $region53: #{tpu_custom_call.1} parent=1 // pred_fallthru
      _
    %399 = vsyncpa [#allocation3], 1
    %400 = vsyncpa [#allocation6], 1
    %401 = vsyncpa [#allocation9], 1
    %402 = vsyncpa [#allocation4], 1

</llo_original>
